<compile_context>
chip_gen: v7x
topology: tpu7x:2x2x1
jax: 0.10.0
libtpu: 0.0.40
codegen_flags: <defaults>
</compile_context>

<pallas_src>
import functools
import math

import jax
import jax.numpy as jnp
import numpy as np
from jax.experimental import pallas as pl
from jax.experimental.pallas import tpu as pltpu


def _layer_norm(x, gamma, beta, eps=1e-5):
    # Two-pass variance in f32 (numerically safer than E[x^2] - E[x]^2).
    mean = jnp.mean(x, axis=-1, keepdims=True)
    xc = x - mean
    var = jnp.mean(xc * xc, axis=-1, keepdims=True)
    return xc * jax.lax.rsqrt(var + eps) * gamma + beta


def _vmem_limit_bytes(frac=0.8, fallback=64 * 1024 * 1024):
    # Adapt the scoped-VMEM budget to the chip: ~102 MiB on v5e/v6e (128 MiB physical),
    # ~51 MiB on v7x (64 MiB physical), leaving headroom for double buffers / scratch.
    try:
        cap = pltpu.get_tpu_info().vmem_capacity_bytes
    except Exception:
        cap = fallback
    return int(cap * frac)


# --------------------------------------------------------------------------------------
# Kernel 1: LayerNorm1 + fused QKV projection, tiled over (batch, sequence).
# --------------------------------------------------------------------------------------
def _ln_qkv_kernel(x_ref, ln1_g_ref, ln1_b_ref, wqkv_ref, bqkv_ref,
                   q_ref, k_ref, v_ref):
    x = x_ref[0].astype(jnp.float32)                           # (TS, D), f32 VPU math
    h = _layer_norm(x, ln1_g_ref[0], ln1_b_ref[0])
    qkv = jnp.dot(h.astype(jnp.bfloat16), wqkv_ref[...],       # bf16 MXU, f32 accumulate
                  preferred_element_type=jnp.float32) + bqkv_ref[0]
    D = x.shape[1]
    # Three lane-dense (TS, D) stores; layout stays (B, T, D) so no wrapper transposes.
    q_ref[0] = qkv[:, 0 * D:1 * D].astype(q_ref.dtype)
    k_ref[0] = qkv[:, 1 * D:2 * D].astype(k_ref.dtype)
    v_ref[0] = qkv[:, 2 * D:3 * D].astype(v_ref.dtype)


def _ln_qkv(x, params, ts, vmem_limit):
    B, T, D = x.shape
    ln1_g = params["ln1_g"].reshape(1, -1)
    ln1_b = params["ln1_b"].reshape(1, -1)
    w_qkv = params["w_qkv"]
    b_qkv = params["b_qkv"].reshape(1, -1)

    def wspec(p):
        nd = p.ndim
        return pl.BlockSpec(p.shape, lambda b, i, _nd=nd: (0,) * _nd)

    out_sds = jax.ShapeDtypeStruct((B, T, D), jnp.bfloat16)
    out_spec = pl.BlockSpec((1, ts, D), lambda b, i: (b, i, 0))

    flops = 2 * B * T * D * 3 * D
    bytes_accessed = int(x.size * 4 + w_qkv.size * 2 + 3 * B * T * D * 2
                         + (ln1_g.size + ln1_b.size + b_qkv.size) * 4)

    return pl.pallas_call(
        _ln_qkv_kernel,
        out_shape=(out_sds, out_sds, out_sds),
        grid_spec=pltpu.PrefetchScalarGridSpec(
            num_scalar_prefetch=0,
            grid=(B, T // ts),
            in_specs=[pl.BlockSpec((1, ts, D), lambda b, i: (b, i, 0)),
                      wspec(ln1_g), wspec(ln1_b), wspec(w_qkv), wspec(b_qkv)],
            out_specs=(out_spec, out_spec, out_spec),
        ),
        compiler_params=pltpu.CompilerParams(
            dimension_semantics=("parallel", "parallel"),
            vmem_limit_bytes=vmem_limit),
        cost_estimate=pl.CostEstimate(flops=int(flops), transcendentals=int(B * T),
                                      bytes_accessed=bytes_accessed),
    )(x, ln1_g, ln1_b, w_qkv, b_qkv)


# --------------------------------------------------------------------------------------
# Kernel 2: flash-style causal attention on a 1-D lower-triangular (qi, ki) grid
#           (scalar-prefetched index tables), fused with output projection, LayerNorm2
#           and the 2-layer GELU MLP on the diagonal (final) KV tile of each query row.
# --------------------------------------------------------------------------------------
def _attn_mlp_kernel(qi_tab_ref, ki_tab_ref,                     # scalar-prefetch (SMEM)
                     q_ref, k_ref, v_ref,
                     wo_ref, bo_ref, ln2_g_ref, ln2_b_ref,
                     w1_ref, b1_ref, w2_ref, b2_ref,
                     out_ref,
                     q_scr, m_scr, l_scr, acc_scr,
                     *, n_heads, head_dim, tq, tk):
    step = pl.program_id(1)
    qi = qi_tab_ref[step]
    ki = ki_tab_ref[step]
    H, hd = n_heads, head_dim
    scale = 1.0 / math.sqrt(hd)

    @pl.when(ki == 0)
    def _start_row():
        m_scr[...] = jnp.full(m_scr.shape, -jnp.inf, dtype=m_scr.dtype)
        l_scr[...] = jnp.zeros(l_scr.shape, dtype=l_scr.dtype)
        acc_scr[...] = jnp.zeros(acc_scr.shape, dtype=acc_scr.dtype)
        # Head split of the lane-dense (tq, D) query block, done once per query row.
        q_scr[...] = jnp.swapaxes(q_ref[0].reshape(tq, H, hd), 0, 1)   # (H, tq, hd) bf16

    def _accumulate(masked):
        kh = jnp.swapaxes(k_ref[0].reshape(tk, H, hd), 0, 1)           # (H, tk, hd) bf16
        vh = jnp.swapaxes(v_ref[0].reshape(tk, H, hd), 0, 1)           # (H, tk, hd) bf16
        # Heads batched into a single MXU batched-matmul; f32 accumulation.
        s = jnp.einsum("hqd,hkd->hqk", q_scr[...], kh,
                       preferred_element_type=jnp.float32) * scale
        if masked:
            # Diagonal tile only (tq == tk and qi == ki): local row >= col mask.
            row = jax.lax.broadcasted_iota(jnp.int32, (tq, tk), 0)
            col = jax.lax.broadcasted_iota(jnp.int32, (tq, tk), 1)
            s = s + jnp.where(row >= col, 0.0, -1e30)[None, :, :]
        m_prev = m_scr[...]                                            # (H, tq, 1)
        m_new = jnp.maximum(m_prev, jnp.max(s, axis=-1, keepdims=True))
        alpha = jnp.exp(m_prev - m_new)
        p = jnp.exp(s - m_new)                                         # f32 softmax math
        l_scr[...] = alpha * l_scr[...] + jnp.sum(p, axis=-1, keepdims=True)
        acc_scr[...] = alpha * acc_scr[...] + jnp.einsum(
            "hqk,hkd->hqd", p.astype(jnp.bfloat16), vh,
            preferred_element_type=jnp.float32)
        m_scr[...] = m_new

    @pl.when(ki < qi)          # interior tiles: fully unmasked, no mask VPU ops
    def _interior():
        _accumulate(masked=False)

    @pl.when(ki == qi)         # diagonal tile: mask, then finalize this query row
    def _diagonal():
        _accumulate(masked=True)
        inv_l = pl.reciprocal(l_scr[...], approx=True)                 # EUP slot, ~free
        attn = acc_scr[...] * inv_l                                    # (H, tq, hd) f32
        attn = jnp.swapaxes(attn, 0, 1).reshape(tq, H * hd)            # single head merge
        y = jnp.dot(attn.astype(jnp.bfloat16), wo_ref[...],
                    preferred_element_type=jnp.float32) + bo_ref[0]
        h2 = _layer_norm(y, ln2_g_ref[0], ln2_b_ref[0])
        m1 = jnp.dot(h2.astype(jnp.bfloat16), w1_ref[...],
                     preferred_element_type=jnp.float32) + b1_ref[0]
        # TODO(synk): torch nn.GELU() default is the exact erf GELU; tanh approximation used here.
        m1 = jax.nn.gelu(m1, approximate=True)
        o = jnp.dot(m1.astype(jnp.bfloat16), w2_ref[...],
                    preferred_element_type=jnp.float32) + b2_ref[0]
        out_ref[0] = o.astype(out_ref.dtype)


def _attn_mlp(q, k, v, params, n_heads, tq, tk, out_dtype, vmem_limit):
    B, T, D = q.shape
    assert tq == tk, "causal diagonal logic requires tq == tk"
    hd = D // n_heads
    Dm = params["w1"].shape[1]
    nq = T // tq

    # 1-D lower-triangular enumeration of (qi, ki): upper-triangle steps never exist,
    # so no wasted KV DMA and no wasted grid-step overhead.
    qi_tab = np.concatenate([np.full(i + 1, i, dtype=np.int32) for i in range(nq)])
    ki_tab = np.concatenate([np.arange(i + 1, dtype=np.int32) for i in range(nq)])
    n_steps = int(qi_tab.shape[0])

    w_o = params["w_o"]
    b_o = params["b_o"].reshape(1, -1)
    ln2_g = params["ln2_g"].reshape(1, -1)
    ln2_b = params["ln2_b"].reshape(1, -1)
    w1 = params["w1"]
    b1 = params["b1"].reshape(1, -1)
    w2 = params["w2"]
    b2 = params["b2"].reshape(1, -1)

    def wspec(p):
        nd = p.ndim
        return pl.BlockSpec(p.shape, lambda b, s, qt, kt, _nd=nd: (0,) * _nd)

    kernel = functools.partial(_attn_mlp_kernel, n_heads=n_heads, head_dim=hd,
                               tq=tq, tk=tk)

    flops = (2 * B * n_heads * T * T * hd      # causal qk^T + p@v (~triangular)
             + 2 * B * T * D * D               # output projection
             + 4 * B * T * D * Dm)             # MLP
    transc = B * n_heads * T * T // 2 + B * T * Dm + 2 * B * T
    bytes_accessed = int(B * nq * tq * D * 2                       # q (once per row)
                         + 2 * B * n_steps * tk * D * 2            # k + v tiles
                         + (w_o.size + w1.size + w2.size) * 2
                         + B * T * D * 4)                          # output

    return pl.pallas_call(
        kernel,
        out_shape=jax.ShapeDtypeStruct((B, T, D), out_dtype),
        grid_spec=pltpu.PrefetchScalarGridSpec(
            num_scalar_prefetch=2,
            grid=(B, n_steps),
            in_specs=[
                pl.BlockSpec((1, tq, D), lambda b, s, qt, kt: (b, qt[s], 0)),
                pl.BlockSpec((1, tk, D), lambda b, s, qt, kt: (b, kt[s], 0)),
                pl.BlockSpec((1, tk, D), lambda b, s, qt, kt: (b, kt[s], 0)),
                wspec(w_o), wspec(b_o), wspec(ln2_g), wspec(ln2_b),
                wspec(w1), wspec(b1), wspec(w2), wspec(b2),
            ],
            out_specs=pl.BlockSpec((1, tq, D), lambda b, s, qt, kt: (b, qt[s], 0)),
            scratch_shapes=[
                pltpu.VMEM((n_heads, tq, hd), jnp.bfloat16),   # head-split q (per row)
                pltpu.VMEM((n_heads, tq, 1), jnp.float32),     # running max
                pltpu.VMEM((n_heads, tq, 1), jnp.float32),     # running denom
                pltpu.VMEM((n_heads, tq, hd), jnp.float32),    # running numerator
            ],
        ),
        compiler_params=pltpu.CompilerParams(
            dimension_semantics=("parallel", "arbitrary"),
            vmem_limit_bytes=vmem_limit),
        cost_estimate=pl.CostEstimate(flops=int(flops), transcendentals=int(transc),
                                      bytes_accessed=bytes_accessed),
    )(jnp.asarray(qi_tab), jnp.asarray(ki_tab), q, k, v,
      w_o, b_o, ln2_g, ln2_b, w1, b1, w2, b2)


def transformer_decoder_block(x, params, n_heads, *, seq_tile=256):
    """x: (B, T, D) float32.  params: dict of weights (see init_params)."""
    B, T, D = x.shape
    assert D % n_heads == 0

    def pick_tile(t):
        for cand in (seq_tile, 128, 64, 32, 16, 8):
            if cand <= t and t % cand == 0:
                return cand
        return t

    ts = pick_tile(T)        # row tile for LN1 + QKV
    tq = tk = pick_tile(T)   # flash-attention query/kv tiles (equal: causal diagonal logic)
    vmem_limit = _vmem_limit_bytes()

    q, k, v = _ln_qkv(x, params, ts, vmem_limit)      # (B, T, D) bf16 each, lane-dense
    return _attn_mlp(q, k, v, params, n_heads, tq, tk, x.dtype, vmem_limit)


def init_params(key, embed_size, mlp_hidden):
    ks = jax.random.split(key, 8)
    scale = 0.02
    f32, bf16 = jnp.float32, jnp.bfloat16
    return {
        "ln1_g": jnp.ones((embed_size,), f32),
        "ln1_b": jnp.zeros((embed_size,), f32),
        "w_qkv": (scale * jax.random.normal(ks[0], (embed_size, 3 * embed_size), f32)).astype(bf16),
        "b_qkv": scale * jax.random.normal(ks[1], (3 * embed_size,), f32),
        "w_o":   (scale * jax.random.normal(ks[2], (embed_size, embed_size), f32)).astype(bf16),
        "b_o":   scale * jax.random.normal(ks[3], (embed_size,), f32),
        "ln2_g": jnp.ones((embed_size,), f32),
        "ln2_b": jnp.zeros((embed_size,), f32),
        "w1":    (scale * jax.random.normal(ks[4], (embed_size, mlp_hidden), f32)).astype(bf16),
        "b1":    scale * jax.random.normal(ks[5], (mlp_hidden,), f32),
        "w2":    (scale * jax.random.normal(ks[6], (mlp_hidden, embed_size), f32)).astype(bf16),
        "b2":    scale * jax.random.normal(ks[7], (embed_size,), f32),
    }


def reference(x, params, n_heads):
    """Pure-JAX reference mirroring the kernel's precision choices (bf16 MXU, f32 accum)."""
    B, T, D = x.shape
    hd = D // n_heads
    h = _layer_norm(x, params["ln1_g"], params["ln1_b"])
    qkv = jnp.dot(h.astype(jnp.bfloat16), params["w_qkv"],
                  preferred_element_type=jnp.float32) + params["b_qkv"]
    q = qkv[..., :D].astype(jnp.bfloat16)
    k = qkv[..., D:2 * D].astype(jnp.bfloat16)
    v = qkv[..., 2 * D:].astype(jnp.bfloat16)

    def split(t):
        return t.reshape(B, T, n_heads, hd).transpose(0, 2, 1, 3)

    q, k, v = split(q), split(k), split(v)
    s = jnp.einsum("bhqd,bhkd->bhqk", q, k,
                   preferred_element_type=jnp.float32) / math.sqrt(hd)
    mask = jnp.tril(jnp.ones((T, T), bool))
    s = s + jnp.where(mask, 0.0, -1e30)
    p = jax.nn.softmax(s, axis=-1)
    o = jnp.einsum("bhqk,bhkd->bhqd", p.astype(jnp.bfloat16), v,
                   preferred_element_type=jnp.float32)
    o = o.transpose(0, 2, 1, 3).reshape(B, T, D)
    y = jnp.dot(o.astype(jnp.bfloat16), params["w_o"],
                preferred_element_type=jnp.float32) + params["b_o"]
    h2 = _layer_norm(y, params["ln2_g"], params["ln2_b"])
    m = jnp.dot(h2.astype(jnp.bfloat16), params["w1"],
                preferred_element_type=jnp.float32) + params["b1"]
    m = jax.nn.gelu(m, approximate=True)
    return jnp.dot(m.astype(jnp.bfloat16), params["w2"],
                   preferred_element_type=jnp.float32) + params["b2"]


if __name__ == "__main__":
    B, T, D = 2, 16, 32
    n_heads = 4
    mlp_hidden = 64

    key = jax.random.PRNGKey(0)
    kx, kp = jax.random.split(key)
    x = jax.random.normal(kx, (B, T, D), jnp.float32)
    params = init_params(kp, D, mlp_hidden)

    # seq_tile=8 -> 2 query tiles, 3 triangular grid steps: exercises interior + diagonal
    # branches and the online-softmax carry across KV tiles.
    out = transformer_decoder_block(x, params, n_heads, seq_tile=8)
    out = jax.block_until_ready(out)

    ref = reference(x, params, n_heads)
    np.testing.assert_allclose(np.asarray(out), np.asarray(ref), rtol=2e-2, atol=2e-3)

    print("KERNEL_OK")
</pallas_src>

<mosaic_0001>
module attributes {stable_mosaic.version = 11 : i64} {
  func.func @_ln_qkv_kernel(%arg0: i32, %arg1: i32, %arg2: memref<1x8x32xf32, #tpu.memory_space<vmem>>, %arg3: memref<1x32xf32, #tpu.memory_space<vmem>>, %arg4: memref<1x32xf32, #tpu.memory_space<vmem>>, %arg5: memref<32x96xbf16, #tpu.memory_space<vmem>>, %arg6: memref<1x96xf32, #tpu.memory_space<vmem>>, %arg7: memref<1x8x32xbf16, #tpu.memory_space<vmem>>, %arg8: memref<1x8x32xbf16, #tpu.memory_space<vmem>>, %arg9: memref<1x8x32xbf16, #tpu.memory_space<vmem>>) attributes {dimension_semantics = [#tpu.dimension_semantics<parallel>, #tpu.dimension_semantics<parallel>], iteration_bounds = array<i64: 2, 2>, scalar_prefetch = 0 : i64, scratch_operands = 0 : i64, tpu.core_type = #tpu.core_type<tc>, window_params = [{transform_indices = @transform_0, window_bounds = array<i64: 1, 8, 32>}, {pipeline_mode = #tpu.pipeline_mode<synchronous>, transform_indices = @transform_1, window_bounds = array<i64: 1, 32>}, {pipeline_mode = #tpu.pipeline_mode<synchronous>, transform_indices = @transform_2, window_bounds = array<i64: 1, 32>}, {pipeline_mode = #tpu.pipeline_mode<synchronous>, transform_indices = @transform_3, window_bounds = array<i64: 32, 96>}, {pipeline_mode = #tpu.pipeline_mode<synchronous>, transform_indices = @transform_4, window_bounds = array<i64: 1, 96>}, {transform_indices = @transform_5, window_bounds = array<i64: 1, 8, 32>}, {transform_indices = @transform_6, window_bounds = array<i64: 1, 8, 32>}, {transform_indices = @transform_7, window_bounds = array<i64: 1, 8, 32>}]} {
    %c0 = arith.constant 0 : index
    %c0_0 = arith.constant 0 : index
    %c0_1 = arith.constant 0 : index
    %0 = vector.load %arg2[%c0, %c0_0, %c0_1] : memref<1x8x32xf32, #tpu.memory_space<vmem>>, vector<1x8x32xf32>
    %1 = vector.shape_cast %0 : vector<1x8x32xf32> to vector<8x32xf32>
    %c0_2 = arith.constant 0 : index
    %c0_3 = arith.constant 0 : index
    %2 = vector.load %arg3[%c0_2, %c0_3] : memref<1x32xf32, #tpu.memory_space<vmem>>, vector<1x32xf32>
    %3 = vector.shape_cast %2 : vector<1x32xf32> to vector<32xf32>
    %c0_4 = arith.constant 0 : index
    %c0_5 = arith.constant 0 : index
    %4 = vector.load %arg4[%c0_4, %c0_5] : memref<1x32xf32, #tpu.memory_space<vmem>>, vector<1x32xf32>
    %5 = vector.shape_cast %4 : vector<1x32xf32> to vector<32xf32>
    %cst = arith.constant dense<0.000000e+00> : vector<8xf32>
    %6 = vector.multi_reduction <add>, %1, %cst [1] : vector<8x32xf32> to vector<8xf32>
    %7 = vector.shape_cast %6 : vector<8xf32> to vector<8x1xf32>
    %cst_6 = arith.constant 3.200000e+01 : f32
    %8 = vector.broadcast %cst_6 : f32 to vector<8x1xf32>
    %9 = arith.divf %7, %8 : vector<8x1xf32>
    %10 = vector.broadcast %9 : vector<8x1xf32> to vector<8x32xf32>
    %11 = arith.subf %1, %10 : vector<8x32xf32>
    %12 = arith.mulf %11, %11 : vector<8x32xf32>
    %cst_7 = arith.constant dense<0.000000e+00> : vector<8xf32>
    %13 = vector.multi_reduction <add>, %12, %cst_7 [1] : vector<8x32xf32> to vector<8xf32>
    %14 = vector.shape_cast %13 : vector<8xf32> to vector<8x1xf32>
    %cst_8 = arith.constant 3.200000e+01 : f32
    %15 = vector.broadcast %cst_8 : f32 to vector<8x1xf32>
    %16 = arith.divf %14, %15 : vector<8x1xf32>
    %cst_9 = arith.constant 9.99999974E-6 : f32
    %17 = vector.broadcast %cst_9 : f32 to vector<8x1xf32>
    %18 = arith.addf %16, %17 : vector<8x1xf32>
    %19 = math.rsqrt %18 : vector<8x1xf32>
    %20 = vector.broadcast %19 : vector<8x1xf32> to vector<8x32xf32>
    %21 = arith.mulf %11, %20 : vector<8x32xf32>
    %22 = vector.shape_cast %3 : vector<32xf32> to vector<1x32xf32>
    %23 = vector.broadcast %22 : vector<1x32xf32> to vector<8x32xf32>
    %24 = arith.mulf %21, %23 : vector<8x32xf32>
    %25 = vector.shape_cast %5 : vector<32xf32> to vector<1x32xf32>
    %26 = vector.broadcast %25 : vector<1x32xf32> to vector<8x32xf32>
    %27 = arith.addf %24, %26 : vector<8x32xf32>
    %28 = arith.truncf %27 : vector<8x32xf32> to vector<8x32xbf16>
    %c0_10 = arith.constant 0 : index
    %c0_11 = arith.constant 0 : index
    %29 = vector.load %arg5[%c0_10, %c0_11] : memref<32x96xbf16, #tpu.memory_space<vmem>>, vector<32x96xbf16>
    %cst_12 = arith.constant dense<0.000000e+00> : vector<8x96xf32>
    %30 = tpu.matmul %28, %29, %cst_12 {dimension_numbers = #tpu.dot_dimension_numbers<[1], [0], [0], [1], [0, 0, 1, 1], [], []>} : vector<8x32xbf16>, vector<32x96xbf16>, vector<8x96xf32> -> vector<8x96xf32>
    %c0_13 = arith.constant 0 : index
    %c0_14 = arith.constant 0 : index
    %31 = vector.load %arg6[%c0_13, %c0_14] : memref<1x96xf32, #tpu.memory_space<vmem>>, vector<1x96xf32>
    %32 = vector.shape_cast %31 : vector<1x96xf32> to vector<96xf32>
    %33 = vector.shape_cast %32 : vector<96xf32> to vector<1x96xf32>
    %34 = vector.broadcast %33 : vector<1x96xf32> to vector<8x96xf32>
    %35 = arith.addf %30, %34 : vector<8x96xf32>
    %36 = vector.extract_strided_slice %35 {offsets = [0, 0], sizes = [8, 32], strides = [1, 1]} : vector<8x96xf32> to vector<8x32xf32>
    %37 = arith.truncf %36 : vector<8x32xf32> to vector<8x32xbf16>
    %c0_15 = arith.constant 0 : index
    %c0_16 = arith.constant 0 : index
    %c0_17 = arith.constant 0 : index
    %38 = vector.load %arg7[%c0_15, %c0_16, %c0_17] : memref<1x8x32xbf16, #tpu.memory_space<vmem>>, vector<1x8x32xbf16>
    %39 = vector.shape_cast %38 : vector<1x8x32xbf16> to vector<8x32xbf16>
    %40 = vector.shape_cast %37 : vector<8x32xbf16> to vector<1x8x32xbf16>
    tpu.vector_store %arg7[%c0_15, %c0_16, %c0_17], %40 {strides = array<i32>} : memref<1x8x32xbf16, #tpu.memory_space<vmem>>, vector<1x8x32xbf16>,
    %41 = vector.extract_strided_slice %35 {offsets = [0, 32], sizes = [8, 32], strides = [1, 1]} : vector<8x96xf32> to vector<8x32xf32>
    %42 = arith.truncf %41 : vector<8x32xf32> to vector<8x32xbf16>
    %c0_18 = arith.constant 0 : index
    %c0_19 = arith.constant 0 : index
    %c0_20 = arith.constant 0 : index
    %43 = vector.load %arg8[%c0_18, %c0_19, %c0_20] : memref<1x8x32xbf16, #tpu.memory_space<vmem>>, vector<1x8x32xbf16>
    %44 = vector.shape_cast %43 : vector<1x8x32xbf16> to vector<8x32xbf16>
    %45 = vector.shape_cast %42 : vector<8x32xbf16> to vector<1x8x32xbf16>
    tpu.vector_store %arg8[%c0_18, %c0_19, %c0_20], %45 {strides = array<i32>} : memref<1x8x32xbf16, #tpu.memory_space<vmem>>, vector<1x8x32xbf16>,
    %46 = vector.extract_strided_slice %35 {offsets = [0, 64], sizes = [8, 32], strides = [1, 1]} : vector<8x96xf32> to vector<8x32xf32>
    %47 = arith.truncf %46 : vector<8x32xf32> to vector<8x32xbf16>
    %c0_21 = arith.constant 0 : index
    %c0_22 = arith.constant 0 : index
    %c0_23 = arith.constant 0 : index
    %48 = vector.load %arg9[%c0_21, %c0_22, %c0_23] : memref<1x8x32xbf16, #tpu.memory_space<vmem>>, vector<1x8x32xbf16>
    %49 = vector.shape_cast %48 : vector<1x8x32xbf16> to vector<8x32xbf16>
    %50 = vector.shape_cast %47 : vector<8x32xbf16> to vector<1x8x32xbf16>
    tpu.vector_store %arg9[%c0_21, %c0_22, %c0_23], %50 {strides = array<i32>} : memref<1x8x32xbf16, #tpu.memory_space<vmem>>, vector<1x8x32xbf16>,
    return
  }
  func.func @transform_0(%arg0: i32, %arg1: i32) -> (i32, i32, i32) {
    %c0_i32 = arith.constant 0 : i32
    %c0_i32_0 = arith.constant 0 : i32
    return %arg0, %arg1, %c0_i32 : i32, i32, i32
  }
  func.func @transform_1(%arg0: i32, %arg1: i32) -> (i32, i32) {
    %c0_i32 = arith.constant 0 : i32
    %c0_i32_0 = arith.constant 0 : i32
    %c0_i32_1 = arith.constant 0 : i32
    return %c0_i32, %c0_i32_0 : i32, i32
  }
  func.func @transform_2(%arg0: i32, %arg1: i32) -> (i32, i32) {
    %c0_i32 = arith.constant 0 : i32
    %c0_i32_0 = arith.constant 0 : i32
    %c0_i32_1 = arith.constant 0 : i32
    return %c0_i32, %c0_i32_0 : i32, i32
  }
  func.func @transform_3(%arg0: i32, %arg1: i32) -> (i32, i32) {
    %c0_i32 = arith.constant 0 : i32
    %c0_i32_0 = arith.constant 0 : i32
    %c0_i32_1 = arith.constant 0 : i32
    return %c0_i32, %c0_i32_0 : i32, i32
  }
  func.func @transform_4(%arg0: i32, %arg1: i32) -> (i32, i32) {
    %c0_i32 = arith.constant 0 : i32
    %c0_i32_0 = arith.constant 0 : i32
    %c0_i32_1 = arith.constant 0 : i32
    return %c0_i32, %c0_i32_0 : i32, i32
  }
  func.func @transform_5(%arg0: i32, %arg1: i32) -> (i32, i32, i32) {
    %c0_i32 = arith.constant 0 : i32
    %c0_i32_0 = arith.constant 0 : i32
    return %arg0, %arg1, %c0_i32 : i32, i32, i32
  }
  func.func @transform_6(%arg0: i32, %arg1: i32) -> (i32, i32, i32) {
    %c0_i32 = arith.constant 0 : i32
    %c0_i32_0 = arith.constant 0 : i32
    return %arg0, %arg1, %c0_i32 : i32, i32, i32
  }
  func.func @transform_7(%arg0: i32, %arg1: i32) -> (i32, i32, i32) {
    %c0_i32 = arith.constant 0 : i32
    %c0_i32_0 = arith.constant 0 : i32
    return %arg0, %arg1, %c0_i32 : i32, i32, i32
  }
}

</mosaic_0001>

<llo_original>
// kernel: tpu_custom_call.1
$region0: #{tpu_custom_call.1}
  #allocation0 [shape = 'u32[]', space=smem, size = 0x4, offset = 0x4, fixed_abs, tag = 'smem constant byte address 0x4 - core index']
  #allocation1 [shape = 'u32[144,128]{1,0:T(1,128)}', space=vmem, size = 0x12000, scoped, tag = 'internal scratch']
  %s0 = inlined_call_operand.hbm [shape: f32[2,16,32], index: 0, kind: input, shape index: {}]
  %s1 = inlined_call_operand.vmem [shape: f32[1,32], index: 1, kind: input, shape index: {}]
  %s2 = inlined_call_operand.vmem [shape: f32[1,32], index: 2, kind: input, shape index: {}]
  %s3 = inlined_call_operand.hbm [shape: bf16[32,96], index: 3, kind: input, shape index: {}]
  %s4 = inlined_call_operand.vmem [shape: f32[1,96], index: 4, kind: input, shape index: {}]
  %s5 = inlined_call_operand.hbm [shape: bf16[2,16,32], index: 5, kind: output, shape index: {0}]
  %s6 = inlined_call_operand.hbm [shape: bf16[2,16,32], index: 6, kind: output, shape index: {1}]
  %s7 = inlined_call_operand.hbm [shape: bf16[2,16,32], index: 7, kind: output, shape index: {2}]
  %8 = xla_tuple %s5, %s6, %s7
  %s9 = sld [smem:[#allocation0]]
  $region77: #{tpu_custom_call.1} parent=0
    _
  %s11 = ssub.s32 1, %s9
  %s12 = scalar_select 0, %s11, %s9
  $region1: #{tpu_custom_call.1} parent=0
    #allocation2 [shape = 'u8[8192]{0}', space=vmem, size = 0x2000, scoped, tag = 'input window, operand 0']
    #allocation3 [shape = 's32[2]{0}', space=sflag, size = 0x8, scoped, tag = 'scoped memory for tpu_custom_call.1']
    #allocation4 [shape = 's32[2]{0}', space=sflag, size = 0x8, scoped, tag = 'scoped memory for tpu_custom_call.1']
    #allocation5 [shape = 'u8[8192]{0}', space=vmem, size = 0x2000, scoped, tag = 'input window, operand 3, single buffered']
    #allocation6 [shape = 's32[1]{0}', space=sflag, size = 0x4, scoped, tag = 'scoped memory for tpu_custom_call.1']
    #allocation7 [shape = 'u8[4096]{0}', space=vmem, size = 0x1000, scoped, tag = 'output window, operand 0']
    #allocation8 [shape = 'u8[4096]{0}', space=vmem, size = 0x1000, scoped, tag = 'output window, operand 1']
    #allocation9 [shape = 's32[2]{0}', space=sflag, size = 0x8, scoped, tag = 'scoped memory for tpu_custom_call.1']
    #allocation10 [shape = 'u8[4096]{0}', space=vmem, size = 0x1000, scoped, tag = 'output window, operand 2']
    %13 = vsyncpa [#allocation3], 0
    %s14 = scalar_lea.sflag [#allocation3], 1
    %15 = vsyncpa %s14, 0
    %16 = vsyncpa [#allocation6], 0
    %17 = vsyncpa [#allocation4], 0
    %s18 = scalar_lea.sflag [#allocation4], 1
    %19 = vsyncpa %s18, 0
    %20 = vsyncpa [#allocation9], 0
    %s21 = scalar_lea.sflag [#allocation9], 1
    %22 = vsyncpa %s21, 0
    loop: start=0, step=1, limit=6
    $region2: #{tpu_custom_call.1} parent=1 // loop_pre_header
      _
    $region3: #{tpu_custom_call.1} parent=1 // loop_header
      %s24 = sphi 0, %s28
      %p25 = scmp.ge.s32.totalorder %s24, 6
      %s31 = sphi 0, %s43
      %s32 = sphi 0, %s39
      %s33 = sphi 0, %s31
      %s34 = sphi 0, %s32
      %s35 = sphi 0, %s33
      %s36 = sphi 0, %s34
      %s48 = sphi 0, %s50
      %s51 = sphi 0, %s48
      %s52 = sphi 0, %s51
      %s68 = sphi 0, %s52
      %s72 = sphi 0, %s72
      %s74 = sphi 0, %s72
      %s75 = sphi 0, %s74
      %s89 = sphi 0, %s75
      %s93 = sphi 0, %s93
      %s95 = sphi 0, %s93
      %s96 = sphi 0, %s95
      %s110 = sphi 0, %s96
      %s114 = sphi 0, %s114
      %s116 = sphi 0, %s114
      %s117 = sphi 0, %s116
      %s131 = sphi 0, %s117
      %s135 = sphi 0, %s135
      %s137 = sphi 0, %s135
      %s138 = sphi 0, %s137
      %s152 = sphi 0, %s138
      %s160 = sphi 0, %s162
      %s163 = sphi 0, %s160
      %s164 = sphi 0, %s163
      %s180 = sphi 0, %s164
      %s188 = sphi 0, %s190
      %s191 = sphi 0, %s188
      %s192 = sphi 0, %s191
      %s208 = sphi 0, %s192
      %s216 = sphi 0, %s218
      %s219 = sphi 0, %s216
      %s220 = sphi 0, %s219
      %s236 = sphi 0, %s220
    $region4: #{tpu_custom_call.1} parent=1 // loop_header_branch
      %27 = sbr.rel (%p25) target = $region8
    $region5: #{tpu_custom_call.1} parent=1 // loop_body
      %s29 = ssub.s32 %s24, 1
      %s30 = ssub.s32 %s24, 2
      %s37 = sadd.s32 1, %s32
      %p38 = scmp.ge.s32.totalorder %s37, 2
      %s39 = scalar_select %p38, 0, %s37
      %s40 = sadd.s32 1, %s31
      %s41 = scalar_select %p38, %s40, %s31
      %p42 = scmp.ge.s32.totalorder %s41, 2
      %s43 = scalar_select %p42, 0, %s41
      %s44 = ssub.s32 %s31, %s43
      %s45 = ssub.s32 %s32, %s39
      %s46 = sor.u32 %s44, %s45
      %p47 = scmp.eq.s32.totalorder %s46, 0
      %s49 = sadd.s32 %s48, 1
      %s50 = scalar_select %p47, %s48, %s49
      %p53 = pneg %p47
      %p54 = scmp.eq.s32.totalorder %s24, 3
      %p55 = por %p53, %p54
      %p56 = scmp.ne.s32.totalorder %s48, %s51
      %p57 = scmp.eq.s32.totalorder %s24, 0
      %p58 = por %p56, %p57
      %p59 = scmp.ne.s32.totalorder %s48, %s51
      %p60 = scmp.eq.s32.totalorder %s29, 3
      %p61 = por %p59, %p60
      %p62 = scmp.ne.s32.totalorder %s51, %s52
      %p63 = scmp.eq.s32.totalorder %s29, 0
      %p64 = por %p62, %p63
      %p65 = scmp.ne.s32.totalorder %s51, %s52
      %p66 = scmp.eq.s32.totalorder %s30, 3
      %p67 = por %p65, %p66
      %p69 = scmp.ne.s32.totalorder %s52, %s68
      %p70 = scmp.eq.s32.totalorder %s30, 0
      %p71 = por %p69, %p70
      %s73 = sadd.s32 %s72, 1
      %p76 = scmp.eq.s32.totalorder %s24, 3
      %p77 = scmp.ne.s32.totalorder %s72, %s74
      %p78 = scmp.eq.s32.totalorder %s24, 0
      %p79 = por %p77, %p78
      %p80 = scmp.ne.s32.totalorder %s72, %s74
      %p81 = scmp.eq.s32.totalorder %s29, 3
      %p82 = por %p80, %p81
      %p83 = scmp.ne.s32.totalorder %s74, %s75
      %p84 = scmp.eq.s32.totalorder %s29, 0
      %p85 = por %p83, %p84
      %p86 = scmp.ne.s32.totalorder %s74, %s75
      %p87 = scmp.eq.s32.totalorder %s30, 3
      %p88 = por %p86, %p87
      %p90 = scmp.ne.s32.totalorder %s75, %s89
      %p91 = scmp.eq.s32.totalorder %s30, 0
      %p92 = por %p90, %p91
      %s94 = sadd.s32 %s93, 1
      %p97 = scmp.eq.s32.totalorder %s24, 3
      %p98 = scmp.ne.s32.totalorder %s93, %s95
      %p99 = scmp.eq.s32.totalorder %s24, 0
      %p100 = por %p98, %p99
      %p101 = scmp.ne.s32.totalorder %s93, %s95
      %p102 = scmp.eq.s32.totalorder %s29, 3
      %p103 = por %p101, %p102
      %p104 = scmp.ne.s32.totalorder %s95, %s96
      %p105 = scmp.eq.s32.totalorder %s29, 0
      %p106 = por %p104, %p105
      %p107 = scmp.ne.s32.totalorder %s95, %s96
      %p108 = scmp.eq.s32.totalorder %s30, 3
      %p109 = por %p107, %p108
      %p111 = scmp.ne.s32.totalorder %s96, %s110
      %p112 = scmp.eq.s32.totalorder %s30, 0
      %p113 = por %p111, %p112
      %s115 = sadd.s32 %s114, 1
      %p118 = scmp.eq.s32.totalorder %s24, 3
      %p119 = scmp.ne.s32.totalorder %s114, %s116
      %p120 = scmp.eq.s32.totalorder %s24, 0
      %p121 = por %p119, %p120
      %p122 = scmp.ne.s32.totalorder %s114, %s116
      %p123 = scmp.eq.s32.totalorder %s29, 3
      %p124 = por %p122, %p123
      %p125 = scmp.ne.s32.totalorder %s116, %s117
      %p126 = scmp.eq.s32.totalorder %s29, 0
      %p127 = por %p125, %p126
      %p128 = scmp.ne.s32.totalorder %s116, %s117
      %p129 = scmp.eq.s32.totalorder %s30, 3
      %p130 = por %p128, %p129
      %p132 = scmp.ne.s32.totalorder %s117, %s131
      %p133 = scmp.eq.s32.totalorder %s30, 0
      %p134 = por %p132, %p133
      %s136 = sadd.s32 %s135, 1
      %p139 = scmp.eq.s32.totalorder %s24, 3
      %p140 = scmp.ne.s32.totalorder %s135, %s137
      %p141 = scmp.eq.s32.totalorder %s24, 0
      %p142 = por %p140, %p141
      %p143 = scmp.ne.s32.totalorder %s135, %s137
      %p144 = scmp.eq.s32.totalorder %s29, 3
      %p145 = por %p143, %p144
      %p146 = scmp.ne.s32.totalorder %s137, %s138
      %p147 = scmp.eq.s32.totalorder %s29, 0
      %p148 = por %p146, %p147
      %p149 = scmp.ne.s32.totalorder %s137, %s138
      %p150 = scmp.eq.s32.totalorder %s30, 3
      %p151 = por %p149, %p150
      %p153 = scmp.ne.s32.totalorder %s138, %s152
      %p154 = scmp.eq.s32.totalorder %s30, 0
      %p155 = por %p153, %p154
      %s156 = ssub.s32 %s31, %s43
      %s157 = ssub.s32 %s32, %s39
      %s158 = sor.u32 %s156, %s157
      %p159 = scmp.eq.s32.totalorder %s158, 0
      %s161 = sadd.s32 %s160, 1
      %s162 = scalar_select %p159, %s160, %s161
      %p165 = pneg %p159
      %p166 = scmp.eq.s32.totalorder %s24, 3
      %p167 = por %p165, %p166
      %p168 = scmp.ne.s32.totalorder %s160, %s163
      %p169 = scmp.eq.s32.totalorder %s24, 0
      %p170 = por %p168, %p169
      %p171 = scmp.ne.s32.totalorder %s160, %s163
      %p172 = scmp.eq.s32.totalorder %s29, 3
      %p173 = por %p171, %p172
      %p174 = scmp.ne.s32.totalorder %s163, %s164
      %p175 = scmp.eq.s32.totalorder %s29, 0
      %p176 = por %p174, %p175
      %p177 = scmp.ne.s32.totalorder %s163, %s164
      %p178 = scmp.eq.s32.totalorder %s30, 3
      %p179 = por %p177, %p178
      %p181 = scmp.ne.s32.totalorder %s164, %s180
      %p182 = scmp.eq.s32.totalorder %s30, 0
      %p183 = por %p181, %p182
      %s184 = ssub.s32 %s31, %s43
      %s185 = ssub.s32 %s32, %s39
      %s186 = sor.u32 %s184, %s185
      %p187 = scmp.eq.s32.totalorder %s186, 0
      %s189 = sadd.s32 %s188, 1
      %s190 = scalar_select %p187, %s188, %s189
      %p193 = pneg %p187
      %p194 = scmp.eq.s32.totalorder %s24, 3
      %p195 = por %p193, %p194
      %p196 = scmp.ne.s32.totalorder %s188, %s191
      %p197 = scmp.eq.s32.totalorder %s24, 0
      %p198 = por %p196, %p197
      %p199 = scmp.ne.s32.totalorder %s188, %s191
      %p200 = scmp.eq.s32.totalorder %s29, 3
      %p201 = por %p199, %p200
      %p202 = scmp.ne.s32.totalorder %s191, %s192
      %p203 = scmp.eq.s32.totalorder %s29, 0
      %p204 = por %p202, %p203
      %p205 = scmp.ne.s32.totalorder %s191, %s192
      %p206 = scmp.eq.s32.totalorder %s30, 3
      %p207 = por %p205, %p206
      %p209 = scmp.ne.s32.totalorder %s192, %s208
      %p210 = scmp.eq.s32.totalorder %s30, 0
      %p211 = por %p209, %p210
      %s212 = ssub.s32 %s31, %s43
      %s213 = ssub.s32 %s32, %s39
      %s214 = sor.u32 %s212, %s213
      %p215 = scmp.eq.s32.totalorder %s214, 0
      %s217 = sadd.s32 %s216, 1
      %s218 = scalar_select %p215, %s216, %s217
      %p221 = pneg %p215
      %p222 = scmp.eq.s32.totalorder %s24, 3
      %p223 = por %p221, %p222
      %p224 = scmp.ne.s32.totalorder %s216, %s219
      %p225 = scmp.eq.s32.totalorder %s24, 0
      %p226 = por %p224, %p225
      %p227 = scmp.ne.s32.totalorder %s216, %s219
      %p228 = scmp.eq.s32.totalorder %s29, 3
      %p229 = por %p227, %p228
      %p230 = scmp.ne.s32.totalorder %s219, %s220
      %p231 = scmp.eq.s32.totalorder %s29, 0
      %p232 = por %p230, %p231
      %p233 = scmp.ne.s32.totalorder %s219, %s220
      %p234 = scmp.eq.s32.totalorder %s30, 3
      %p235 = por %p233, %p234
      %p237 = scmp.ne.s32.totalorder %s220, %s236
      %p238 = scmp.eq.s32.totalorder %s30, 0
      %p239 = por %p237, %p238
      %p240 = scmp.le.s32.totalorder 1, %s24
      %p241 = scmp.lt.s32.totalorder %s24, 5
      %p242 = pnand %p240, %p241
      %p243 = pneg %p242
      // Predicated region
      $region9: #{tpu_custom_call.1} parent=5 // pred_check
        _
      $region10: #{tpu_custom_call.1} parent=5 // pred_check_branch
        %245 = sbr.rel (%p242) target = $region12
      $region11: #{tpu_custom_call.1} parent=5 // pred_region
        %s246 = ssub.s32 %s24, 1
        // Predicated region
        $region13: #{tpu_custom_call.1} parent=11 // pred_check
          %p247 = pneg %p85
        $region14: #{tpu_custom_call.1} parent=11 // pred_check_branch
          %249 = sbr.rel (%p247) target = $region16
        $region15: #{tpu_custom_call.1} parent=11 // pred_region
          _
        $region16: #{tpu_custom_call.1} parent=11 // pred_fallthru
          _
        // Predicated region
        $region17: #{tpu_custom_call.1} parent=11 // pred_check
          %p250 = pneg %p106
        $region18: #{tpu_custom_call.1} parent=11 // pred_check_branch
          %252 = sbr.rel (%p250) target = $region20
        $region19: #{tpu_custom_call.1} parent=11 // pred_region
          _
        $region20: #{tpu_custom_call.1} parent=11 // pred_fallthru
          _
        // Predicated region
        $region21: #{tpu_custom_call.1} parent=11 // pred_check
          %p253 = pneg %p127
        $region22: #{tpu_custom_call.1} parent=11 // pred_check_branch
          %255 = sbr.rel (%p253) target = $region24
        $region23: #{tpu_custom_call.1} parent=11 // pred_region
          %s257 = ssub.s32 256, 256
          %258 = vsyncadd [#allocation6], %s257
          %s259 = sshll.u32 [#allocation5], 4
          %s260 = int_to_ptr.vmem [resolvable:$true] %s259
          %265 = dma.hbm_to_vmem [thread:$0]  %s3, 256, %s260, [#allocation6], 64, 64, 4
        $region24: #{tpu_custom_call.1} parent=11 // pred_fallthru
          _
        // Predicated region
        $region25: #{tpu_custom_call.1} parent=11 // pred_check
          %p266 = pneg %p148
        $region26: #{tpu_custom_call.1} parent=11 // pred_check_branch
          %268 = sbr.rel (%p266) target = $region28
        $region27: #{tpu_custom_call.1} parent=11 // pred_region
          _
        $region28: #{tpu_custom_call.1} parent=11 // pred_fallthru
          _
      $region12: #{tpu_custom_call.1} parent=5 // pred_fallthru
        _
      %p269 = scmp.lt.s32.totalorder %s24, 4
      // Predicated region
      $region29: #{tpu_custom_call.1} parent=5 // pred_check
        %p270 = pneg %p269
      $region30: #{tpu_custom_call.1} parent=5 // pred_check_branch
        %272 = sbr.rel (%p270) target = $region32
      $region31: #{tpu_custom_call.1} parent=5 // pred_region
        // Predicated region
        $region33: #{tpu_custom_call.1} parent=31 // pred_check
          %p273 = pneg %p58
        $region34: #{tpu_custom_call.1} parent=31 // pred_check_branch
          %275 = sbr.rel (%p273) target = $region36
        $region35: #{tpu_custom_call.1} parent=31 // pred_region
          %s276 = sand.u32 %s48, 1
          %s277 = scalar_lea.sflag [#allocation3], %s276
          %s278 = sand.u32 %s48, 1
          %s279 = smul.addr %s278, 8
          %s280 = scalar_lea.vmem [#allocation2], %s279
          %s282 = ssub.s32 128, 128
          %283 = vsyncadd %s277, %s282
          %s284 = smul.addr %s31, 2
          %s285 = sadd.s32 %s32, %s284
          %s286 = smul.addr %s285, 128
          %s287 = scalar_lea.hbm %s0, %s286
          %s289 = sshll.u32 %s280, 4
          %s290 = int_to_ptr.vmem [resolvable:$true] %s289
          %292 = dma.hbm_to_vmem [thread:$0]  %s287, 128, %s290, %s277
        $region36: #{tpu_custom_call.1} parent=31 // pred_fallthru
          _
      $region32: #{tpu_custom_call.1} parent=5 // pred_fallthru
        _
      %p293 = scmp.le.s32.totalorder 1, %s24
      %p294 = scmp.lt.s32.totalorder %s24, 5
      %p295 = pnand %p293, %p294
      %p296 = pneg %p295
      // Predicated region
      $region37: #{tpu_custom_call.1} parent=5 // pred_check
        _
      $region38: #{tpu_custom_call.1} parent=5 // pred_check_branch
        %298 = sbr.rel (%p295) target = $region40
      $region39: #{tpu_custom_call.1} parent=5 // pred_region
        %s299 = ssub.s32 %s24, 1
        %s300 = sand.u32 %s51, 1
        %s301 = scalar_lea.sflag [#allocation3], %s300
        %s302 = sand.u32 %s51, 1
        %s303 = smul.addr %s302, 8
        %s304 = scalar_lea.vmem [#allocation2], %s303
        // Predicated region
        $region41: #{tpu_custom_call.1} parent=39 // pred_check
          %p305 = pneg %p64
        $region42: #{tpu_custom_call.1} parent=39 // pred_check_branch
          %307 = sbr.rel (%p305) target = $region44
        $region43: #{tpu_custom_call.1} parent=39 // pred_region
          %308 = dma.done %s301, 128
        $region44: #{tpu_custom_call.1} parent=39 // pred_fallthru
          _
        // Predicated region
        $region45: #{tpu_custom_call.1} parent=39 // pred_check
          %p309 = pneg %p127
        $region46: #{tpu_custom_call.1} parent=39 // pred_check_branch
          %311 = sbr.rel (%p309) target = $region48
        $region47: #{tpu_custom_call.1} parent=39 // pred_region
          %312 = dma.done [#allocation6], 256
        $region48: #{tpu_custom_call.1} parent=39 // pred_fallthru
          _
        %s313 = sand.u32 %s51, 1
        %s314 = scalar_lea.sflag [#allocation3], %s313
        %s315 = sand.u32 %s51, 1
        %s316 = smul.addr %s315, 8
        %s317 = scalar_lea.vmem [#allocation2], %s316
        %p318 = pneg %p64
        %p319 = pneg %p61
        %p320 = pneg %p85
        %p321 = pneg %p82
        %p322 = pneg %p106
        %p323 = pneg %p103
        %p324 = pneg %p127
        %p325 = pneg %p124
        %p326 = pneg %p148
        %p327 = pneg %p145
        %p328 = pneg %p176
        %p329 = pneg %p173
        %s330 = sand.u32 %s163, 1
        %s331 = scalar_lea.sflag [#allocation4], %s330
        %s332 = sand.u32 %s163, 1
        %s333 = smul.addr %s332, 4
        %s334 = scalar_lea.vmem [#allocation7], %s333
        %p335 = pneg %p204
        %p336 = pneg %p201
        %s337 = sand.u32 %s29, 1
        %s338 = scalar_lea.sflag [#allocation9], %s337
        %s339 = sand.u32 %s191, 1
        %s340 = smul.addr %s339, 4
        %s341 = scalar_lea.vmem [#allocation8], %s340
        %p342 = pneg %p232
        %p343 = pneg %p229
        %s344 = sand.u32 %s29, 1
        %s345 = scalar_lea.sflag [#allocation9], %s344
        %s346 = sand.u32 %s219, 1
        %s347 = smul.addr %s346, 4
        %s348 = scalar_lea.vmem [#allocation10], %s347
        %v350 = vld [vmem:[%s304] sm:$0xff]
        %v351 = vld [vmem:[%s1] sm:$0x1]
        %v352 = vld [vmem:[%s2] sm:$0x1]
        %vm353 = vcmask 261120
        %v354 = vsel %vm353, %v350, 0.0
        %355 = vadd.xlane.f32.xlu0 %v354
        %v356 = vpop.xlane.xlu0 %355
        %v357 = vrcp.pop 32.0
        %v358 = vmul.f32 %v356, %v357
        %v359 = vsub.f32 %v350, %v358
        %v360 = vmul.f32 %v359, %v359
        %v361 = vsel %vm353, %v360, 0.0
        %362 = vadd.xlane.f32.xlu0 %v361
        %v363 = vpop.xlane.xlu0 %362
        %v364 = vmul.f32 %v363, %v357
        %v365 = vadd.f32 %v364, 1e-05
        %v366 = vrsqrt.pop %v365
        %v367 = vmul.f32 %v359, %v366
        %v369 = vlaneseq
        %v370 = vshrl.u32 %v369, 7
        %v371 = vsub.s32 0, %v370
        %v372 = vrot.slane %v351, %v371
        %v374 = vmul.f32 %v367, %v372
        %v376 = vlaneseq
        %v377 = vshrl.u32 %v376, 7
        %v378 = vsub.s32 0, %v377
        %v379 = vrot.slane %v352, %v378
        %v381 = vadd.f32 %v374, %v379
        %v382 = vpack.c.bf16 %v381, %v381
        %v383 = vld [vmem:[#allocation5] sm:$0xf]
        %v384 = vld [vmem:[#allocation5 + $0x4] sm:$0xf]
        %v385 = vld [vmem:[#allocation5 + $0x8] sm:$0xf]
        %v386 = vld [vmem:[#allocation5 + $0xc] sm:$0xf]
        %v387 = vld [vmem:[%s4] sm:$0x1]
        %v389 = vlaneseq
        %v390 = vshrl.u32 %v389, 7
        %v391 = vsub.s32 0, %v390
        %v392 = vrot.slane %v387, %v391
        %v398 = vunpack.c.l.b16 %v383
        %v399 = vunpack.c.l.b16 %v384
        %v400 = vunpack.c.l.b16 %v385
        %v401 = vunpack.c.l.b16 %v386
        %v402 = vpack.c.b16 %v399, %v398
        %v403 = vpack.c.b16 %v401, %v400
        %v407 = vsel %vm353, %v382, 0
        %409 = vmatprep.subr.bf16.mxu0 0
        %410 = vmatpush1.bf16.msra.mxu0 %v402
        %411 = vmatprep.subr.bf16.mxu0 0
        %412 = vmatpush1.bf16.msra.mxu0 %v403
        %413 = vmatprep.subr.bf16.mxu0 0
        %414 = vmatpush1.bf16.msra.mxu0 0
        %415 = vmatprep.subr.bf16.mxu0 0
        %416 = vmatpush1.bf16.msra.mxu0 0
        %417 = vmatprep.subr.bf16.mxu0 0
        %418 = vmatpush1.bf16.msra.mxu0 0
        %419 = vmatprep.subr.bf16.mxu0 0
        %420 = vmatpush1.bf16.msra.mxu0 0
        %421 = vmatprep.subr.bf16.mxu0 0
        %422 = vmatpush1.bf16.msra.mxu0 0
        %423 = vmatprep.subr.bf16.mxu0 0
        %424 = vmatpush1.bf16.msra.mxu0 0
        %425 = vmatprep.subr.bf16.mxu0 0
        %426 = vmatpush1.bf16.msra.mxu0 0
        %427 = vmatprep.subr.bf16.mxu0 0
        %428 = vmatpush1.bf16.msra.mxu0 0
        %429 = vmatprep.subr.bf16.mxu0 0
        %430 = vmatpush1.bf16.msra.mxu0 0
        %431 = vmatprep.subr.bf16.mxu0 0
        %432 = vmatpush1.bf16.msra.mxu0 0
        %433 = vmatprep.subr.bf16.mxu0 0
        %434 = vmatpush1.bf16.msra.mxu0 0
        %435 = vmatprep.subr.bf16.mxu0 0
        %436 = vmatpush1.bf16.msra.mxu0 0
        %437 = vmatprep.subr.bf16.mxu0 0
        %438 = vmatpush1.bf16.msra.mxu0 0
        %439 = vmatprep.subr.bf16.mxu0 0
        %440 = vmatpush1.bf16.msra.mxu0 0
        %441 = vmatprep.mubr.bf16.mxu0 0
        %442 = vmatmul.mubr.bf16.gmra.mrb[0].mxu0 %v407
        %v443 = vpop.f32.mrb[0].mxu0
        %v444 = vadd.f32 %v392, %v443
        %v445 = vpop.f32.mrb[0].mxu0
        %v446 = vpop.f32.mrb[0].mxu0
        %v447 = vpop.f32.mrb[0].mxu0
        %448 = vdwg.mxu0
        %v449 = vpack.c.bf16 %v444, %v444
        %vm450 = vcmask 257024
        %451 = vst.msk [vmem:[%s334] sm:$0xf] %vm450, %v449
        %v453 = vunpack.c.l.b16 %v449
        %v454 = vpack.c.b16 %v453, %v453
        %455 = vrot.lane.b32.xlu0 %v454, 96
        %v456 = vpop.permute.xlu0 %455
        %458 = vst.msk [vmem:[%s341] sm:$0xf] %vm450, %v456
        %459 = vrot.lane.b32.xlu0 %v454, 64
        %v460 = vpop.permute.xlu0 %459
        %462 = vst.msk [vmem:[%s348] sm:$0xf] %vm450, %v460
        %s463 = sand.u32 %s163, 1
        %s464 = scalar_lea.sflag [#allocation4], %s463
        %s465 = sand.u32 %s163, 1
        %s466 = smul.addr %s465, 4
        %s467 = scalar_lea.vmem [#allocation7], %s466
        %s468 = sand.u32 %s29, 1
        %s469 = scalar_lea.sflag [#allocation9], %s468
        %s470 = sand.u32 %s191, 1
        %s471 = smul.addr %s470, 4
        %s472 = scalar_lea.vmem [#allocation8], %s471
        %s473 = sand.u32 %s29, 1
        %s474 = scalar_lea.sflag [#allocation9], %s473
        %s475 = sand.u32 %s219, 1
        %s476 = smul.addr %s475, 4
        %s477 = scalar_lea.vmem [#allocation10], %s476
        // Predicated region
        $region49: #{tpu_custom_call.1} parent=39 // pred_check
          %p478 = pneg %p173
        $region50: #{tpu_custom_call.1} parent=39 // pred_check_branch
          %480 = sbr.rel (%p478) target = $region52
        $region51: #{tpu_custom_call.1} parent=39 // pred_region
          %s482 = ssub.s32 64, 64
          %483 = vsyncadd %s464, %s482
          %s484 = smul.addr %s33, 2
          %s485 = sadd.s32 %s34, %s484
          %s486 = smul.addr %s485, 64
          %s487 = scalar_lea.hbm %s5, %s486
          %s489 = sshll.u32 %s467, 4
          %s490 = int_to_ptr.vmem [resolvable:$true] %s489
          %492 = dma.vmem_to_hbm [thread:$0]  %s490, 64, %s487, %s464
        $region52: #{tpu_custom_call.1} parent=39 // pred_fallthru
          _
        // Predicated region
        $region53: #{tpu_custom_call.1} parent=39 // pred_check
          %p493 = pneg %p201
        $region54: #{tpu_custom_call.1} parent=39 // pred_check_branch
          %495 = sbr.rel (%p493) target = $region56
        $region55: #{tpu_custom_call.1} parent=39 // pred_region
          %s497 = ssub.s32 64, 64
          %498 = vsyncadd %s469, %s497
          %s499 = smul.addr %s33, 2
          %s500 = sadd.s32 %s34, %s499
          %s501 = smul.addr %s500, 64
          %s502 = scalar_lea.hbm %s6, %s501
          %s504 = sshll.u32 %s472, 4
          %s505 = int_to_ptr.vmem [resolvable:$true] %s504
          %507 = dma.vmem_to_hbm [thread:$0]  %s505, 64, %s502, %s469
        $region56: #{tpu_custom_call.1} parent=39 // pred_fallthru
          _
        // Predicated region
        $region57: #{tpu_custom_call.1} parent=39 // pred_check
          %p508 = pneg %p229
        $region58: #{tpu_custom_call.1} parent=39 // pred_check_branch
          %510 = sbr.rel (%p508) target = $region60
        $region59: #{tpu_custom_call.1} parent=39 // pred_region
          %s512 = ssub.s32 64, 64
          %513 = vsyncadd %s474, %s512
          %s514 = smul.addr %s33, 2
          %s515 = sadd.s32 %s34, %s514
          %s516 = smul.addr %s515, 64
          %s517 = scalar_lea.hbm %s7, %s516
          %s519 = sshll.u32 %s477, 4
          %s520 = int_to_ptr.vmem [resolvable:$true] %s519
          %522 = dma.vmem_to_hbm [thread:$0]  %s520, 64, %s517, %s474
        $region60: #{tpu_custom_call.1} parent=39 // pred_fallthru
          _
      $region40: #{tpu_custom_call.1} parent=5 // pred_fallthru
        _
      %p523 = scmp.le.s32.totalorder 2, %s24
      // Predicated region
      $region61: #{tpu_custom_call.1} parent=5 // pred_check
        %p524 = pneg %p523
      $region62: #{tpu_custom_call.1} parent=5 // pred_check_branch
        %526 = sbr.rel (%p524) target = $region64
      $region63: #{tpu_custom_call.1} parent=5 // pred_region
        %s527 = ssub.s32 %s24, 2
        // Predicated region
        $region65: #{tpu_custom_call.1} parent=63 // pred_check
          %p528 = pneg %p179
        $region66: #{tpu_custom_call.1} parent=63 // pred_check_branch
          %530 = sbr.rel (%p528) target = $region68
        $region67: #{tpu_custom_call.1} parent=63 // pred_region
          %s531 = sand.u32 %s164, 1
          %s532 = scalar_lea.sflag [#allocation4], %s531
          %s533 = sand.u32 %s164, 1
          %s534 = smul.addr %s533, 4
          %s535 = scalar_lea.vmem [#allocation7], %s534
          %536 = dma.done %s532, 64
        $region68: #{tpu_custom_call.1} parent=63 // pred_fallthru
          _
        // Predicated region
        $region69: #{tpu_custom_call.1} parent=63 // pred_check
          %p537 = pneg %p207
        $region70: #{tpu_custom_call.1} parent=63 // pred_check_branch
          %539 = sbr.rel (%p537) target = $region72
        $region71: #{tpu_custom_call.1} parent=63 // pred_region
          %s540 = sand.u32 %s30, 1
          %s541 = scalar_lea.sflag [#allocation9], %s540
          %s542 = sand.u32 %s192, 1
          %s543 = smul.addr %s542, 4
          %s544 = scalar_lea.vmem [#allocation8], %s543
          %545 = dma.done %s541, 64
        $region72: #{tpu_custom_call.1} parent=63 // pred_fallthru
          _
        // Predicated region
        $region73: #{tpu_custom_call.1} parent=63 // pred_check
          %p546 = pneg %p235
        $region74: #{tpu_custom_call.1} parent=63 // pred_check_branch
          %548 = sbr.rel (%p546) target = $region76
        $region75: #{tpu_custom_call.1} parent=63 // pred_region
          %s549 = sand.u32 %s30, 1
          %s550 = scalar_lea.sflag [#allocation9], %s549
          %s551 = sand.u32 %s220, 1
          %s552 = smul.addr %s551, 4
          %s553 = scalar_lea.vmem [#allocation10], %s552
          %554 = dma.done %s550, 64
        $region76: #{tpu_custom_call.1} parent=63 // pred_fallthru
          _
      $region64: #{tpu_custom_call.1} parent=5 // pred_fallthru
        _
    $region6: #{tpu_custom_call.1} parent=1 // loop_footer
      %s28 = sadd.s32 1, %s24
    $region7: #{tpu_custom_call.1} parent=1 // loop_footer_branch
      %23 = sbr.rel target = $region3
    $region8: #{tpu_custom_call.1} parent=1 // loop_exit
      _
    %555 = vsyncpa [#allocation3], 1
    %s556 = scalar_lea.sflag [#allocation3], 1
    %557 = vsyncpa %s556, 1
    %558 = vsyncpa [#allocation6], 1
    %559 = vsyncpa [#allocation4], 1
    %s560 = scalar_lea.sflag [#allocation4], 1
    %561 = vsyncpa %s560, 1
    %562 = vsyncpa [#allocation9], 1
    %s563 = scalar_lea.sflag [#allocation9], 1
    %564 = vsyncpa %s563, 1

</llo_original>
